<compile_context>
chip_gen: v7x
topology: tpu7x:2x2x1
jax: 0.10.0
libtpu: 0.0.40
codegen_flags: <defaults>
</compile_context>

<pallas_src>
import jax
import jax.numpy as jnp
from jax import lax
from jax.experimental import pallas as pl
from jax.experimental.pallas import tpu as pltpu

# ----------------------------- sizes (small) ---------------------------------
B = 2          # batch
L = 8          # sequence length
E = 32         # emb_dim
H = 32         # hidden_dim (must be even)
HH = H // 2    # per-direction hidden
VOCAB = 128    # char vocabulary for make_char_emb


# ------------------------------- kernel --------------------------------------
def bigru_kernel(x_ref,        # (L*B, 2E)   rows: step t -> [x[t] | x[L-1-t]]
                 w_in_ref,     # (2E, 6*HH)  per-gate block-diag input weights
                 b_in_ref,     # (1, 6*HH)   input bias (+ r/z hidden bias folded)
                 w_hh_ref,     # (2*HH, 6*HH) per-gate block-diag recurrent weights
                 b_hn_ref,     # (1, 2*HH)   hidden bias of the n gate (fwd|bwd)
                 out_ref):     # (B, H)
    batch = out_ref.shape[0]
    hh2 = w_hh_ref.shape[0]               # 2*HH (fwd + bwd lanes per gate)
    seq_len = x_ref.shape[0] // batch

    # --- off-critical-path: one batched matmul for every step & direction ----
    gi_all = jnp.dot(x_ref[...], w_in_ref[...],
                     preferred_element_type=jnp.float32) + b_in_ref[...]
    # column layout of gi_all / gh: [ r_f r_b | z_f z_b | n_f n_b ]

    w_hh = w_hh_ref[...]
    bhn = jnp.broadcast_to(b_hn_ref[...], (batch, hh2))   # hoisted broadcast

    # hidden state packed as [h_fwd | h_bwd]
    h = jnp.zeros((batch, hh2), jnp.float32)

    # --- fully unrolled serial recurrence: one fused matmul per step ---------
    for t in range(seq_len):
        gi = gi_all[t * batch:(t + 1) * batch, :]          # static slice (B, 6HH)
        gh = jnp.dot(h, w_hh, preferred_element_type=jnp.float32)
        r = jax.nn.sigmoid(gi[:, 0 * hh2:1 * hh2] + gh[:, 0 * hh2:1 * hh2])
        z = jax.nn.sigmoid(gi[:, 1 * hh2:2 * hh2] + gh[:, 1 * hh2:2 * hh2])
        n = jnp.tanh(gi[:, 2 * hh2:3 * hh2] + r * (gh[:, 2 * hh2:3 * hh2] + bhn))
        h = (1.0 - z) * n + z * h

    # h = [final forward hidden | final backward hidden] == torch concat order
    out_ref[...] = h                                        # single dense store


# ------------------------- weight repacking (glue) ----------------------------
def _gate_blockdiag(wf, wb, hh):
    """wf, wb: (in_dim, 3*hh) with column layout [r|z|n].
    Returns (2*in_dim, 6*hh) weight whose columns are [rf rb | zf zb | nf nb]
    and whose rows are block-diagonal per gate: top rows -> fwd, bottom -> bwd."""
    in_dim = wf.shape[0]
    zeros = jnp.zeros((in_dim, hh), wf.dtype)
    blocks = []
    for g in range(3):
        top = jnp.concatenate([wf[:, g * hh:(g + 1) * hh], zeros], axis=1)
        bot = jnp.concatenate([zeros, wb[:, g * hh:(g + 1) * hh]], axis=1)
        blocks.append(jnp.concatenate([top, bot], axis=0))   # (2*in_dim, 2*hh)
    return jnp.concatenate(blocks, axis=1)                   # (2*in_dim, 6*hh)


def _pack_biases(bif, bib, bhf, bhb, hh):
    """Fold input bias + (r, z) hidden biases into one (1, 6*hh) vector; keep the
    n-gate hidden bias separate (it sits inside the r*(...) term)."""
    parts = []
    for g in range(2):                     # r and z gates: hidden bias folds in
        parts.append(bif[:, g * hh:(g + 1) * hh] + bhf[:, g * hh:(g + 1) * hh])
        parts.append(bib[:, g * hh:(g + 1) * hh] + bhb[:, g * hh:(g + 1) * hh])
    parts.append(bif[:, 2 * hh:3 * hh])    # n gate: input bias only
    parts.append(bib[:, 2 * hh:3 * hh])
    b_in = jnp.concatenate(parts, axis=1)                          # (1, 6*hh)
    b_hn = jnp.concatenate([bhf[:, 2 * hh:3 * hh],
                            bhb[:, 2 * hh:3 * hh]], axis=1)        # (1, 2*hh)
    return b_in, b_hn


# --------------------------------- wrapper ------------------------------------
def txt_rnn_forward(tokens, params):
    # embedding lookup (index_select equivalent) + time-major + bwd reversal
    emb = params["emb"][tokens]                      # (B, L, E)
    x_f = jnp.transpose(emb, (1, 0, 2))              # (L, B, E)  forward order
    x_b = x_f[::-1]                                  # (L, B, E)  backward order
    x_cat = jnp.concatenate([x_f, x_b], axis=-1).reshape(L * B, 2 * E)

    w_in = _gate_blockdiag(params["w_ih_f"], params["w_ih_b"], HH)   # (2E, 6HH)
    w_hh = _gate_blockdiag(params["w_hh_f"], params["w_hh_b"], HH)   # (2HH, 6HH)
    b_in, b_hn = _pack_biases(params["b_ih_f"], params["b_ih_b"],
                              params["b_hh_f"], params["b_hh_b"], HH)

    vmem = pl.BlockSpec(memory_space=pltpu.MemorySpace.VMEM)
    return pl.pallas_call(
        bigru_kernel,
        out_shape=jax.ShapeDtypeStruct((B, H), jnp.float32),
        in_specs=[vmem, vmem, vmem, vmem, vmem],
        out_specs=vmem,
    )(x_cat, w_in, b_in, w_hh, b_hn)


# --------------------------- pure-JAX reference -------------------------------
def txt_rnn_reference(tokens, params):
    emb = params["emb"][tokens]                      # (B, L, E)

    def gru_dir(x_seq, wi, wh, bi, bh):              # x_seq: (L, B, E)
        def step(h, x_t):
            gi = x_t @ wi + bi
            gh = h @ wh + bh
            r = jax.nn.sigmoid(gi[:, :HH] + gh[:, :HH])
            z = jax.nn.sigmoid(gi[:, HH:2 * HH] + gh[:, HH:2 * HH])
            n = jnp.tanh(gi[:, 2 * HH:] + r * gh[:, 2 * HH:])
            h_new = (1.0 - z) * n + z * h
            return h_new, h_new
        h0 = jnp.zeros((tokens.shape[0], HH), jnp.float32)
        h_last, _ = lax.scan(step, h0, x_seq)
        return h_last

    x_tm = jnp.transpose(emb, (1, 0, 2))
    hf = gru_dir(x_tm, params["w_ih_f"], params["w_hh_f"],
                 params["b_ih_f"][0], params["b_hh_f"][0])
    hb = gru_dir(x_tm[::-1], params["w_ih_b"], params["w_hh_b"],
                 params["b_ih_b"][0], params["b_hh_b"][0])
    return jnp.concatenate([hf, hb], axis=1)


# ------------------------------ param init ------------------------------------
def init_params(key):
    ks = jax.random.split(key, 9)
    scale = 1.0 / jnp.sqrt(HH)

    def u(k, shape):
        return jax.random.uniform(k, shape, jnp.float32, -scale, scale)

    return {
        # make_char_emb -> learned nn.Embedding(VOCAB, E)
        "emb": jax.random.normal(ks[0], (VOCAB, E), jnp.float32) * 0.1,
        # forward direction (stored transposed: (in, 3*HH) / (HH, 3*HH))
        "w_ih_f": u(ks[1], (E, 3 * HH)),
        "w_hh_f": u(ks[2], (HH, 3 * HH)),
        "b_ih_f": u(ks[3], (1, 3 * HH)),
        "b_hh_f": u(ks[4], (1, 3 * HH)),
        # backward direction
        "w_ih_b": u(ks[5], (E, 3 * HH)),
        "w_hh_b": u(ks[6], (HH, 3 * HH)),
        "b_ih_b": u(ks[7], (1, 3 * HH)),
        "b_hh_b": u(ks[8], (1, 3 * HH)),
    }


# ---------------------------------- main ---------------------------------------
if __name__ == "__main__":
    key = jax.random.PRNGKey(0)
    k_param, k_tok = jax.random.split(key)

    params = init_params(k_param)
    tokens = jax.random.randint(k_tok, (B, L), 0, VOCAB, dtype=jnp.int32)

    fwd = jax.jit(txt_rnn_forward)
    out = jax.block_until_ready(fwd(tokens, params))

    ref = jax.block_until_ready(txt_rnn_reference(tokens, params))
    assert out.shape == (B, H)
    assert jnp.allclose(out, ref, atol=2e-3, rtol=2e-3), (
        f"max abs err {jnp.max(jnp.abs(out - ref))}")

    print("KERNEL_OK")
</pallas_src>

<mosaic_0001>
module attributes {stable_mosaic.version = 11 : i64} {
  func.func @bigru_kernel(%arg0: memref<16x64xf32, #tpu.memory_space<vmem>>, %arg1: memref<64x96xf32, #tpu.memory_space<vmem>>, %arg2: memref<1x96xf32, #tpu.memory_space<vmem>>, %arg3: memref<32x96xf32, #tpu.memory_space<vmem>>, %arg4: memref<1x32xf32, #tpu.memory_space<vmem>>, %arg5: memref<2x32xf32, #tpu.memory_space<vmem>>) attributes {dimension_semantics = [], scalar_prefetch = 0 : i64, scratch_operands = 0 : i64, tpu.core_type = #tpu.core_type<tc>} {
    %c0 = arith.constant 0 : index
    %c0_0 = arith.constant 0 : index
    %0 = vector.load %arg0[%c0, %c0_0] : memref<16x64xf32, #tpu.memory_space<vmem>>, vector<16x64xf32>
    %c0_1 = arith.constant 0 : index
    %c0_2 = arith.constant 0 : index
    %1 = vector.load %arg1[%c0_1, %c0_2] : memref<64x96xf32, #tpu.memory_space<vmem>>, vector<64x96xf32>
    %cst = arith.constant dense<0.000000e+00> : vector<16x96xf32>
    %2 = tpu.matmul %0, %1, %cst {dimension_numbers = #tpu.dot_dimension_numbers<[1], [0], [0], [1], [0, 0, 1, 1], [], []>} : vector<16x64xf32>, vector<64x96xf32>, vector<16x96xf32> -> vector<16x96xf32>
    %c0_3 = arith.constant 0 : index
    %c0_4 = arith.constant 0 : index
    %3 = vector.load %arg2[%c0_3, %c0_4] : memref<1x96xf32, #tpu.memory_space<vmem>>, vector<1x96xf32>
    %4 = vector.broadcast %3 : vector<1x96xf32> to vector<16x96xf32>
    %5 = arith.addf %2, %4 : vector<16x96xf32>
    %c0_5 = arith.constant 0 : index
    %c0_6 = arith.constant 0 : index
    %6 = vector.load %arg3[%c0_5, %c0_6] : memref<32x96xf32, #tpu.memory_space<vmem>>, vector<32x96xf32>
    %c0_7 = arith.constant 0 : index
    %c0_8 = arith.constant 0 : index
    %7 = vector.load %arg4[%c0_7, %c0_8] : memref<1x32xf32, #tpu.memory_space<vmem>>, vector<1x32xf32>
    %8 = vector.shape_cast %7 : vector<1x32xf32> to vector<1x32xf32>
    %9 = vector.broadcast %8 : vector<1x32xf32> to vector<2x32xf32>
    %cst_9 = arith.constant 0.000000e+00 : f32
    %10 = vector.broadcast %cst_9 : f32 to vector<2x32xf32>
    %11 = vector.extract_strided_slice %5 {offsets = [0, 0], sizes = [2, 96], strides = [1, 1]} : vector<16x96xf32> to vector<2x96xf32>
    %cst_10 = arith.constant dense<0.000000e+00> : vector<2x96xf32>
    %12 = tpu.matmul %10, %6, %cst_10 {dimension_numbers = #tpu.dot_dimension_numbers<[1], [0], [0], [1], [0, 0, 1, 1], [], []>} : vector<2x32xf32>, vector<32x96xf32>, vector<2x96xf32> -> vector<2x96xf32>
    %13 = vector.extract_strided_slice %11 {offsets = [0, 0], sizes = [2, 32], strides = [1, 1]} : vector<2x96xf32> to vector<2x32xf32>
    %14 = vector.extract_strided_slice %12 {offsets = [0, 0], sizes = [2, 32], strides = [1, 1]} : vector<2x96xf32> to vector<2x32xf32>
    %15 = arith.addf %13, %14 : vector<2x32xf32>
    %16 = arith.negf %15 : vector<2x32xf32>
    %17 = math.exp %16 : vector<2x32xf32>
    %cst_11 = arith.constant 1.000000e+00 : f32
    %18 = vector.broadcast %cst_11 : f32 to vector<2x32xf32>
    %19 = arith.addf %18, %17 : vector<2x32xf32>
    %20 = arith.divf %18, %19 : vector<2x32xf32>
    %21 = vector.extract_strided_slice %11 {offsets = [0, 32], sizes = [2, 32], strides = [1, 1]} : vector<2x96xf32> to vector<2x32xf32>
    %22 = vector.extract_strided_slice %12 {offsets = [0, 32], sizes = [2, 32], strides = [1, 1]} : vector<2x96xf32> to vector<2x32xf32>
    %23 = arith.addf %21, %22 : vector<2x32xf32>
    %24 = arith.negf %23 : vector<2x32xf32>
    %25 = math.exp %24 : vector<2x32xf32>
    %cst_12 = arith.constant 1.000000e+00 : f32
    %26 = vector.broadcast %cst_12 : f32 to vector<2x32xf32>
    %27 = arith.addf %26, %25 : vector<2x32xf32>
    %28 = arith.divf %26, %27 : vector<2x32xf32>
    %29 = vector.extract_strided_slice %11 {offsets = [0, 64], sizes = [2, 32], strides = [1, 1]} : vector<2x96xf32> to vector<2x32xf32>
    %30 = vector.extract_strided_slice %12 {offsets = [0, 64], sizes = [2, 32], strides = [1, 1]} : vector<2x96xf32> to vector<2x32xf32>
    %31 = arith.addf %30, %9 : vector<2x32xf32>
    %32 = arith.mulf %20, %31 : vector<2x32xf32>
    %33 = arith.addf %29, %32 : vector<2x32xf32>
    %34 = math.tanh %33 : vector<2x32xf32>
    %cst_13 = arith.constant 1.000000e+00 : f32
    %35 = vector.broadcast %cst_13 : f32 to vector<2x32xf32>
    %36 = arith.subf %35, %28 : vector<2x32xf32>
    %37 = arith.mulf %36, %34 : vector<2x32xf32>
    %38 = arith.mulf %28, %10 : vector<2x32xf32>
    %39 = arith.addf %37, %38 : vector<2x32xf32>
    %40 = vector.extract_strided_slice %5 {offsets = [2, 0], sizes = [2, 96], strides = [1, 1]} : vector<16x96xf32> to vector<2x96xf32>
    %cst_14 = arith.constant dense<0.000000e+00> : vector<2x96xf32>
    %41 = tpu.matmul %39, %6, %cst_14 {dimension_numbers = #tpu.dot_dimension_numbers<[1], [0], [0], [1], [0, 0, 1, 1], [], []>} : vector<2x32xf32>, vector<32x96xf32>, vector<2x96xf32> -> vector<2x96xf32>
    %42 = vector.extract_strided_slice %40 {offsets = [0, 0], sizes = [2, 32], strides = [1, 1]} : vector<2x96xf32> to vector<2x32xf32>
    %43 = vector.extract_strided_slice %41 {offsets = [0, 0], sizes = [2, 32], strides = [1, 1]} : vector<2x96xf32> to vector<2x32xf32>
    %44 = arith.addf %42, %43 : vector<2x32xf32>
    %45 = arith.negf %44 : vector<2x32xf32>
    %46 = math.exp %45 : vector<2x32xf32>
    %cst_15 = arith.constant 1.000000e+00 : f32
    %47 = vector.broadcast %cst_15 : f32 to vector<2x32xf32>
    %48 = arith.addf %47, %46 : vector<2x32xf32>
    %49 = arith.divf %47, %48 : vector<2x32xf32>
    %50 = vector.extract_strided_slice %40 {offsets = [0, 32], sizes = [2, 32], strides = [1, 1]} : vector<2x96xf32> to vector<2x32xf32>
    %51 = vector.extract_strided_slice %41 {offsets = [0, 32], sizes = [2, 32], strides = [1, 1]} : vector<2x96xf32> to vector<2x32xf32>
    %52 = arith.addf %50, %51 : vector<2x32xf32>
    %53 = arith.negf %52 : vector<2x32xf32>
    %54 = math.exp %53 : vector<2x32xf32>
    %cst_16 = arith.constant 1.000000e+00 : f32
    %55 = vector.broadcast %cst_16 : f32 to vector<2x32xf32>
    %56 = arith.addf %55, %54 : vector<2x32xf32>
    %57 = arith.divf %55, %56 : vector<2x32xf32>
    %58 = vector.extract_strided_slice %40 {offsets = [0, 64], sizes = [2, 32], strides = [1, 1]} : vector<2x96xf32> to vector<2x32xf32>
    %59 = vector.extract_strided_slice %41 {offsets = [0, 64], sizes = [2, 32], strides = [1, 1]} : vector<2x96xf32> to vector<2x32xf32>
    %60 = arith.addf %59, %9 : vector<2x32xf32>
    %61 = arith.mulf %49, %60 : vector<2x32xf32>
    %62 = arith.addf %58, %61 : vector<2x32xf32>
    %63 = math.tanh %62 : vector<2x32xf32>
    %cst_17 = arith.constant 1.000000e+00 : f32
    %64 = vector.broadcast %cst_17 : f32 to vector<2x32xf32>
    %65 = arith.subf %64, %57 : vector<2x32xf32>
    %66 = arith.mulf %65, %63 : vector<2x32xf32>
    %67 = arith.mulf %57, %39 : vector<2x32xf32>
    %68 = arith.addf %66, %67 : vector<2x32xf32>
    %69 = vector.extract_strided_slice %5 {offsets = [4, 0], sizes = [2, 96], strides = [1, 1]} : vector<16x96xf32> to vector<2x96xf32>
    %cst_18 = arith.constant dense<0.000000e+00> : vector<2x96xf32>
    %70 = tpu.matmul %68, %6, %cst_18 {dimension_numbers = #tpu.dot_dimension_numbers<[1], [0], [0], [1], [0, 0, 1, 1], [], []>} : vector<2x32xf32>, vector<32x96xf32>, vector<2x96xf32> -> vector<2x96xf32>
    %71 = vector.extract_strided_slice %69 {offsets = [0, 0], sizes = [2, 32], strides = [1, 1]} : vector<2x96xf32> to vector<2x32xf32>
    %72 = vector.extract_strided_slice %70 {offsets = [0, 0], sizes = [2, 32], strides = [1, 1]} : vector<2x96xf32> to vector<2x32xf32>
    %73 = arith.addf %71, %72 : vector<2x32xf32>
    %74 = arith.negf %73 : vector<2x32xf32>
    %75 = math.exp %74 : vector<2x32xf32>
    %cst_19 = arith.constant 1.000000e+00 : f32
    %76 = vector.broadcast %cst_19 : f32 to vector<2x32xf32>
    %77 = arith.addf %76, %75 : vector<2x32xf32>
    %78 = arith.divf %76, %77 : vector<2x32xf32>
    %79 = vector.extract_strided_slice %69 {offsets = [0, 32], sizes = [2, 32], strides = [1, 1]} : vector<2x96xf32> to vector<2x32xf32>
    %80 = vector.extract_strided_slice %70 {offsets = [0, 32], sizes = [2, 32], strides = [1, 1]} : vector<2x96xf32> to vector<2x32xf32>
    %81 = arith.addf %79, %80 : vector<2x32xf32>
    %82 = arith.negf %81 : vector<2x32xf32>
    %83 = math.exp %82 : vector<2x32xf32>
    %cst_20 = arith.constant 1.000000e+00 : f32
    %84 = vector.broadcast %cst_20 : f32 to vector<2x32xf32>
    %85 = arith.addf %84, %83 : vector<2x32xf32>
    %86 = arith.divf %84, %85 : vector<2x32xf32>
    %87 = vector.extract_strided_slice %69 {offsets = [0, 64], sizes = [2, 32], strides = [1, 1]} : vector<2x96xf32> to vector<2x32xf32>
    %88 = vector.extract_strided_slice %70 {offsets = [0, 64], sizes = [2, 32], strides = [1, 1]} : vector<2x96xf32> to vector<2x32xf32>
    %89 = arith.addf %88, %9 : vector<2x32xf32>
    %90 = arith.mulf %78, %89 : vector<2x32xf32>
    %91 = arith.addf %87, %90 : vector<2x32xf32>
    %92 = math.tanh %91 : vector<2x32xf32>
    %cst_21 = arith.constant 1.000000e+00 : f32
    %93 = vector.broadcast %cst_21 : f32 to vector<2x32xf32>
    %94 = arith.subf %93, %86 : vector<2x32xf32>
    %95 = arith.mulf %94, %92 : vector<2x32xf32>
    %96 = arith.mulf %86, %68 : vector<2x32xf32>
    %97 = arith.addf %95, %96 : vector<2x32xf32>
    %98 = vector.extract_strided_slice %5 {offsets = [6, 0], sizes = [2, 96], strides = [1, 1]} : vector<16x96xf32> to vector<2x96xf32>
    %cst_22 = arith.constant dense<0.000000e+00> : vector<2x96xf32>
    %99 = tpu.matmul %97, %6, %cst_22 {dimension_numbers = #tpu.dot_dimension_numbers<[1], [0], [0], [1], [0, 0, 1, 1], [], []>} : vector<2x32xf32>, vector<32x96xf32>, vector<2x96xf32> -> vector<2x96xf32>
    %100 = vector.extract_strided_slice %98 {offsets = [0, 0], sizes = [2, 32], strides = [1, 1]} : vector<2x96xf32> to vector<2x32xf32>
    %101 = vector.extract_strided_slice %99 {offsets = [0, 0], sizes = [2, 32], strides = [1, 1]} : vector<2x96xf32> to vector<2x32xf32>
    %102 = arith.addf %100, %101 : vector<2x32xf32>
    %103 = arith.negf %102 : vector<2x32xf32>
    %104 = math.exp %103 : vector<2x32xf32>
    %cst_23 = arith.constant 1.000000e+00 : f32
    %105 = vector.broadcast %cst_23 : f32 to vector<2x32xf32>
    %106 = arith.addf %105, %104 : vector<2x32xf32>
    %107 = arith.divf %105, %106 : vector<2x32xf32>
    %108 = vector.extract_strided_slice %98 {offsets = [0, 32], sizes = [2, 32], strides = [1, 1]} : vector<2x96xf32> to vector<2x32xf32>
    %109 = vector.extract_strided_slice %99 {offsets = [0, 32], sizes = [2, 32], strides = [1, 1]} : vector<2x96xf32> to vector<2x32xf32>
    %110 = arith.addf %108, %109 : vector<2x32xf32>
    %111 = arith.negf %110 : vector<2x32xf32>
    %112 = math.exp %111 : vector<2x32xf32>
    %cst_24 = arith.constant 1.000000e+00 : f32
    %113 = vector.broadcast %cst_24 : f32 to vector<2x32xf32>
    %114 = arith.addf %113, %112 : vector<2x32xf32>
    %115 = arith.divf %113, %114 : vector<2x32xf32>
    %116 = vector.extract_strided_slice %98 {offsets = [0, 64], sizes = [2, 32], strides = [1, 1]} : vector<2x96xf32> to vector<2x32xf32>
    %117 = vector.extract_strided_slice %99 {offsets = [0, 64], sizes = [2, 32], strides = [1, 1]} : vector<2x96xf32> to vector<2x32xf32>
    %118 = arith.addf %117, %9 : vector<2x32xf32>
    %119 = arith.mulf %107, %118 : vector<2x32xf32>
    %120 = arith.addf %116, %119 : vector<2x32xf32>
    %121 = math.tanh %120 : vector<2x32xf32>
    %cst_25 = arith.constant 1.000000e+00 : f32
    %122 = vector.broadcast %cst_25 : f32 to vector<2x32xf32>
    %123 = arith.subf %122, %115 : vector<2x32xf32>
    %124 = arith.mulf %123, %121 : vector<2x32xf32>
    %125 = arith.mulf %115, %97 : vector<2x32xf32>
    %126 = arith.addf %124, %125 : vector<2x32xf32>
    %127 = vector.extract_strided_slice %5 {offsets = [8, 0], sizes = [2, 96], strides = [1, 1]} : vector<16x96xf32> to vector<2x96xf32>
    %cst_26 = arith.constant dense<0.000000e+00> : vector<2x96xf32>
    %128 = tpu.matmul %126, %6, %cst_26 {dimension_numbers = #tpu.dot_dimension_numbers<[1], [0], [0], [1], [0, 0, 1, 1], [], []>} : vector<2x32xf32>, vector<32x96xf32>, vector<2x96xf32> -> vector<2x96xf32>
    %129 = vector.extract_strided_slice %127 {offsets = [0, 0], sizes = [2, 32], strides = [1, 1]} : vector<2x96xf32> to vector<2x32xf32>
    %130 = vector.extract_strided_slice %128 {offsets = [0, 0], sizes = [2, 32], strides = [1, 1]} : vector<2x96xf32> to vector<2x32xf32>
    %131 = arith.addf %129, %130 : vector<2x32xf32>
    %132 = arith.negf %131 : vector<2x32xf32>
    %133 = math.exp %132 : vector<2x32xf32>
    %cst_27 = arith.constant 1.000000e+00 : f32
    %134 = vector.broadcast %cst_27 : f32 to vector<2x32xf32>
    %135 = arith.addf %134, %133 : vector<2x32xf32>
    %136 = arith.divf %134, %135 : vector<2x32xf32>
    %137 = vector.extract_strided_slice %127 {offsets = [0, 32], sizes = [2, 32], strides = [1, 1]} : vector<2x96xf32> to vector<2x32xf32>
    %138 = vector.extract_strided_slice %128 {offsets = [0, 32], sizes = [2, 32], strides = [1, 1]} : vector<2x96xf32> to vector<2x32xf32>
    %139 = arith.addf %137, %138 : vector<2x32xf32>
    %140 = arith.negf %139 : vector<2x32xf32>
    %141 = math.exp %140 : vector<2x32xf32>
    %cst_28 = arith.constant 1.000000e+00 : f32
    %142 = vector.broadcast %cst_28 : f32 to vector<2x32xf32>
    %143 = arith.addf %142, %141 : vector<2x32xf32>
    %144 = arith.divf %142, %143 : vector<2x32xf32>
    %145 = vector.extract_strided_slice %127 {offsets = [0, 64], sizes = [2, 32], strides = [1, 1]} : vector<2x96xf32> to vector<2x32xf32>
    %146 = vector.extract_strided_slice %128 {offsets = [0, 64], sizes = [2, 32], strides = [1, 1]} : vector<2x96xf32> to vector<2x32xf32>
    %147 = arith.addf %146, %9 : vector<2x32xf32>
    %148 = arith.mulf %136, %147 : vector<2x32xf32>
    %149 = arith.addf %145, %148 : vector<2x32xf32>
    %150 = math.tanh %149 : vector<2x32xf32>
    %cst_29 = arith.constant 1.000000e+00 : f32
    %151 = vector.broadcast %cst_29 : f32 to vector<2x32xf32>
    %152 = arith.subf %151, %144 : vector<2x32xf32>
    %153 = arith.mulf %152, %150 : vector<2x32xf32>
    %154 = arith.mulf %144, %126 : vector<2x32xf32>
    %155 = arith.addf %153, %154 : vector<2x32xf32>
    %156 = vector.extract_strided_slice %5 {offsets = [10, 0], sizes = [2, 96], strides = [1, 1]} : vector<16x96xf32> to vector<2x96xf32>
    %cst_30 = arith.constant dense<0.000000e+00> : vector<2x96xf32>
    %157 = tpu.matmul %155, %6, %cst_30 {dimension_numbers = #tpu.dot_dimension_numbers<[1], [0], [0], [1], [0, 0, 1, 1], [], []>} : vector<2x32xf32>, vector<32x96xf32>, vector<2x96xf32> -> vector<2x96xf32>
    %158 = vector.extract_strided_slice %156 {offsets = [0, 0], sizes = [2, 32], strides = [1, 1]} : vector<2x96xf32> to vector<2x32xf32>
    %159 = vector.extract_strided_slice %157 {offsets = [0, 0], sizes = [2, 32], strides = [1, 1]} : vector<2x96xf32> to vector<2x32xf32>
    %160 = arith.addf %158, %159 : vector<2x32xf32>
    %161 = arith.negf %160 : vector<2x32xf32>
    %162 = math.exp %161 : vector<2x32xf32>
    %cst_31 = arith.constant 1.000000e+00 : f32
    %163 = vector.broadcast %cst_31 : f32 to vector<2x32xf32>
    %164 = arith.addf %163, %162 : vector<2x32xf32>
    %165 = arith.divf %163, %164 : vector<2x32xf32>
    %166 = vector.extract_strided_slice %156 {offsets = [0, 32], sizes = [2, 32], strides = [1, 1]} : vector<2x96xf32> to vector<2x32xf32>
    %167 = vector.extract_strided_slice %157 {offsets = [0, 32], sizes = [2, 32], strides = [1, 1]} : vector<2x96xf32> to vector<2x32xf32>
    %168 = arith.addf %166, %167 : vector<2x32xf32>
    %169 = arith.negf %168 : vector<2x32xf32>
    %170 = math.exp %169 : vector<2x32xf32>
    %cst_32 = arith.constant 1.000000e+00 : f32
    %171 = vector.broadcast %cst_32 : f32 to vector<2x32xf32>
    %172 = arith.addf %171, %170 : vector<2x32xf32>
    %173 = arith.divf %171, %172 : vector<2x32xf32>
    %174 = vector.extract_strided_slice %156 {offsets = [0, 64], sizes = [2, 32], strides = [1, 1]} : vector<2x96xf32> to vector<2x32xf32>
    %175 = vector.extract_strided_slice %157 {offsets = [0, 64], sizes = [2, 32], strides = [1, 1]} : vector<2x96xf32> to vector<2x32xf32>
    %176 = arith.addf %175, %9 : vector<2x32xf32>
    %177 = arith.mulf %165, %176 : vector<2x32xf32>
    %178 = arith.addf %174, %177 : vector<2x32xf32>
    %179 = math.tanh %178 : vector<2x32xf32>
    %cst_33 = arith.constant 1.000000e+00 : f32
    %180 = vector.broadcast %cst_33 : f32 to vector<2x32xf32>
    %181 = arith.subf %180, %173 : vector<2x32xf32>
    %182 = arith.mulf %181, %179 : vector<2x32xf32>
    %183 = arith.mulf %173, %155 : vector<2x32xf32>
    %184 = arith.addf %182, %183 : vector<2x32xf32>
    %185 = vector.extract_strided_slice %5 {offsets = [12, 0], sizes = [2, 96], strides = [1, 1]} : vector<16x96xf32> to vector<2x96xf32>
    %cst_34 = arith.constant dense<0.000000e+00> : vector<2x96xf32>
    %186 = tpu.matmul %184, %6, %cst_34 {dimension_numbers = #tpu.dot_dimension_numbers<[1], [0], [0], [1], [0, 0, 1, 1], [], []>} : vector<2x32xf32>, vector<32x96xf32>, vector<2x96xf32> -> vector<2x96xf32>
    %187 = vector.extract_strided_slice %185 {offsets = [0, 0], sizes = [2, 32], strides = [1, 1]} : vector<2x96xf32> to vector<2x32xf32>
    %188 = vector.extract_strided_slice %186 {offsets = [0, 0], sizes = [2, 32], strides = [1, 1]} : vector<2x96xf32> to vector<2x32xf32>
    %189 = arith.addf %187, %188 : vector<2x32xf32>
    %190 = arith.negf %189 : vector<2x32xf32>
    %191 = math.exp %190 : vector<2x32xf32>
    %cst_35 = arith.constant 1.000000e+00 : f32
    %192 = vector.broadcast %cst_35 : f32 to vector<2x32xf32>
    %193 = arith.addf %192, %191 : vector<2x32xf32>
    %194 = arith.divf %192, %193 : vector<2x32xf32>
    %195 = vector.extract_strided_slice %185 {offsets = [0, 32], sizes = [2, 32], strides = [1, 1]} : vector<2x96xf32> to vector<2x32xf32>
    %196 = vector.extract_strided_slice %186 {offsets = [0, 32], sizes = [2, 32], strides = [1, 1]} : vector<2x96xf32> to vector<2x32xf32>
    %197 = arith.addf %195, %196 : vector<2x32xf32>
    %198 = arith.negf %197 : vector<2x32xf32>
    %199 = math.exp %198 : vector<2x32xf32>
    %cst_36 = arith.constant 1.000000e+00 : f32
    %200 = vector.broadcast %cst_36 : f32 to vector<2x32xf32>
    %201 = arith.addf %200, %199 : vector<2x32xf32>
    %202 = arith.divf %200, %201 : vector<2x32xf32>
    %203 = vector.extract_strided_slice %185 {offsets = [0, 64], sizes = [2, 32], strides = [1, 1]} : vector<2x96xf32> to vector<2x32xf32>
    %204 = vector.extract_strided_slice %186 {offsets = [0, 64], sizes = [2, 32], strides = [1, 1]} : vector<2x96xf32> to vector<2x32xf32>
    %205 = arith.addf %204, %9 : vector<2x32xf32>
    %206 = arith.mulf %194, %205 : vector<2x32xf32>
    %207 = arith.addf %203, %206 : vector<2x32xf32>
    %208 = math.tanh %207 : vector<2x32xf32>
    %cst_37 = arith.constant 1.000000e+00 : f32
    %209 = vector.broadcast %cst_37 : f32 to vector<2x32xf32>
    %210 = arith.subf %209, %202 : vector<2x32xf32>
    %211 = arith.mulf %210, %208 : vector<2x32xf32>
    %212 = arith.mulf %202, %184 : vector<2x32xf32>
    %213 = arith.addf %211, %212 : vector<2x32xf32>
    %214 = vector.extract_strided_slice %5 {offsets = [14, 0], sizes = [2, 96], strides = [1, 1]} : vector<16x96xf32> to vector<2x96xf32>
    %cst_38 = arith.constant dense<0.000000e+00> : vector<2x96xf32>
    %215 = tpu.matmul %213, %6, %cst_38 {dimension_numbers = #tpu.dot_dimension_numbers<[1], [0], [0], [1], [0, 0, 1, 1], [], []>} : vector<2x32xf32>, vector<32x96xf32>, vector<2x96xf32> -> vector<2x96xf32>
    %216 = vector.extract_strided_slice %214 {offsets = [0, 0], sizes = [2, 32], strides = [1, 1]} : vector<2x96xf32> to vector<2x32xf32>
    %217 = vector.extract_strided_slice %215 {offsets = [0, 0], sizes = [2, 32], strides = [1, 1]} : vector<2x96xf32> to vector<2x32xf32>
    %218 = arith.addf %216, %217 : vector<2x32xf32>
    %219 = arith.negf %218 : vector<2x32xf32>
    %220 = math.exp %219 : vector<2x32xf32>
    %cst_39 = arith.constant 1.000000e+00 : f32
    %221 = vector.broadcast %cst_39 : f32 to vector<2x32xf32>
    %222 = arith.addf %221, %220 : vector<2x32xf32>
    %223 = arith.divf %221, %222 : vector<2x32xf32>
    %224 = vector.extract_strided_slice %214 {offsets = [0, 32], sizes = [2, 32], strides = [1, 1]} : vector<2x96xf32> to vector<2x32xf32>
    %225 = vector.extract_strided_slice %215 {offsets = [0, 32], sizes = [2, 32], strides = [1, 1]} : vector<2x96xf32> to vector<2x32xf32>
    %226 = arith.addf %224, %225 : vector<2x32xf32>
    %227 = arith.negf %226 : vector<2x32xf32>
    %228 = math.exp %227 : vector<2x32xf32>
    %cst_40 = arith.constant 1.000000e+00 : f32
    %229 = vector.broadcast %cst_40 : f32 to vector<2x32xf32>
    %230 = arith.addf %229, %228 : vector<2x32xf32>
    %231 = arith.divf %229, %230 : vector<2x32xf32>
    %232 = vector.extract_strided_slice %214 {offsets = [0, 64], sizes = [2, 32], strides = [1, 1]} : vector<2x96xf32> to vector<2x32xf32>
    %233 = vector.extract_strided_slice %215 {offsets = [0, 64], sizes = [2, 32], strides = [1, 1]} : vector<2x96xf32> to vector<2x32xf32>
    %234 = arith.addf %233, %9 : vector<2x32xf32>
    %235 = arith.mulf %223, %234 : vector<2x32xf32>
    %236 = arith.addf %232, %235 : vector<2x32xf32>
    %237 = math.tanh %236 : vector<2x32xf32>
    %cst_41 = arith.constant 1.000000e+00 : f32
    %238 = vector.broadcast %cst_41 : f32 to vector<2x32xf32>
    %239 = arith.subf %238, %231 : vector<2x32xf32>
    %240 = arith.mulf %239, %237 : vector<2x32xf32>
    %241 = arith.mulf %231, %213 : vector<2x32xf32>
    %242 = arith.addf %240, %241 : vector<2x32xf32>
    %c0_42 = arith.constant 0 : index
    %c0_43 = arith.constant 0 : index
    %243 = vector.load %arg5[%c0_42, %c0_43] : memref<2x32xf32, #tpu.memory_space<vmem>>, vector<2x32xf32>
    tpu.vector_store %arg5[%c0_42, %c0_43], %242 {strides = array<i32>} : memref<2x32xf32, #tpu.memory_space<vmem>>, vector<2x32xf32>,
    return
  }
}

</mosaic_0001>

<llo_original>
// kernel: txt_rnn_forward.1
$region0: #{txt_rnn_forward.1}
  #allocation0 [shape = 'u32[]', space=smem, size = 0x4, offset = 0x4, fixed_abs, tag = 'smem constant byte address 0x4 - core index']
  #allocation1 [shape = 'u32[144,128]{1,0:T(1,128)}', space=vmem, size = 0x12000, scoped, tag = 'internal scratch']
  %s0 = inlined_call_operand.vmem [shape: f32[16,64], index: 0, kind: input, shape index: {}]
  %s1 = inlined_call_operand.vmem [shape: f32[64,96], index: 1, kind: input, shape index: {}]
  %s2 = inlined_call_operand.vmem [shape: f32[1,96], index: 2, kind: input, shape index: {}]
  %s3 = inlined_call_operand.vmem [shape: f32[32,96], index: 3, kind: input, shape index: {}]
  %s4 = inlined_call_operand.vmem [shape: f32[1,32], index: 4, kind: input, shape index: {}]
  %s5 = inlined_call_operand.hbm [shape: f32[2,32], index: 5, kind: output, shape index: {}]
  %s6 = sld [smem:[#allocation0]]
  $region30: #{txt_rnn_forward.1} parent=0
    _
  %s8 = ssub.s32 1, %s6
  %s9 = scalar_select 0, %s8, %s6
  $region1: #{txt_rnn_forward.1} parent=0
    #allocation2 [shape = 'u8[1024]{0}', space=vmem, size = 0x400, scoped, tag = 'output window, operand 0, single buffered']
    #allocation3 [shape = 's32[1]{0}', space=sflag, size = 0x4, scoped, tag = 'scoped memory for txt_rnn_forward.1']
    %10 = vsyncpa [#allocation3], 0
    // Predicated region
    $region2: #{txt_rnn_forward.1} parent=1 // pred_check
      _
    $region3: #{txt_rnn_forward.1} parent=1 // pred_check_branch
      %12 = sbr.rel (0) target = $region5
    $region4: #{txt_rnn_forward.1} parent=1 // pred_region
      _
    $region5: #{txt_rnn_forward.1} parent=1 // pred_fallthru
      _
    // Predicated region
    $region6: #{txt_rnn_forward.1} parent=1 // pred_check
      _
    $region7: #{txt_rnn_forward.1} parent=1 // pred_check_branch
      %14 = sbr.rel (0) target = $region9
    $region8: #{txt_rnn_forward.1} parent=1 // pred_region
      _
    $region9: #{txt_rnn_forward.1} parent=1 // pred_fallthru
      _
    // Predicated region
    $region10: #{txt_rnn_forward.1} parent=1 // pred_check
      _
    $region11: #{txt_rnn_forward.1} parent=1 // pred_check_branch
      %16 = sbr.rel (0) target = $region13
    $region12: #{txt_rnn_forward.1} parent=1 // pred_region
      _
    $region13: #{txt_rnn_forward.1} parent=1 // pred_fallthru
      _
    // Predicated region
    $region14: #{txt_rnn_forward.1} parent=1 // pred_check
      _
    $region15: #{txt_rnn_forward.1} parent=1 // pred_check_branch
      %18 = sbr.rel (0) target = $region17
    $region16: #{txt_rnn_forward.1} parent=1 // pred_region
      _
    $region17: #{txt_rnn_forward.1} parent=1 // pred_fallthru
      _
    // Predicated region
    $region18: #{txt_rnn_forward.1} parent=1 // pred_check
      _
    $region19: #{txt_rnn_forward.1} parent=1 // pred_check_branch
      %20 = sbr.rel (0) target = $region21
    $region20: #{txt_rnn_forward.1} parent=1 // pred_region
      _
    $region21: #{txt_rnn_forward.1} parent=1 // pred_fallthru
      _
    %v21 = vld [vmem:[%s0] sm:$0xff]
    %v22 = vld [vmem:[%s0 + $0x8] sm:$0xff]
    %v23 = vld [vmem:[%s1] sm:$0xff]
    %v24 = vld [vmem:[%s1 + $0x8] sm:$0xff]
    %v25 = vld [vmem:[%s1 + $0x10] sm:$0xff]
    %v26 = vld [vmem:[%s1 + $0x18] sm:$0xff]
    %v27 = vld [vmem:[%s1 + $0x20] sm:$0xff]
    %v28 = vld [vmem:[%s1 + $0x28] sm:$0xff]
    %v29 = vld [vmem:[%s1 + $0x30] sm:$0xff]
    %v30 = vld [vmem:[%s1 + $0x38] sm:$0xff]
    %v31 = vld [vmem:[%s2] sm:$0x1]
    %v33 = vlaneseq
    %v34 = vshrl.u32 %v33, 7
    %v35 = vsub.s32 0, %v34
    %v36 = vrot.slane %v31, %v35
    %vm38 = vcmask 523264
    %v40 = vsel %vm38, %v21, 0
    %v43 = vsel %vm38, %v22, 0
    %45 = vmatprep.subr.mxu0 0.0
    %46 = vmatpush1.msra.mxu0 %v23
    %47 = vmatprep.subr.mxu0 0.0
    %48 = vmatpush1.msra.mxu0 %v24
    %49 = vmatprep.subr.mxu0 0.0
    %50 = vmatpush1.msra.mxu0 %v25
    %51 = vmatprep.subr.mxu0 0.0
    %52 = vmatpush1.msra.mxu0 %v26
    %53 = vmatprep.subr.mxu0 0.0
    %54 = vmatpush1.msra.mxu0 %v27
    %55 = vmatprep.subr.mxu0 0.0
    %56 = vmatpush1.msra.mxu0 %v28
    %57 = vmatprep.subr.mxu0 0.0
    %58 = vmatpush1.msra.mxu0 %v29
    %59 = vmatprep.subr.mxu0 0.0
    %60 = vmatpush1.msra.mxu0 %v30
    %61 = vmatprep.subr.mxu0 0.0
    %62 = vmatpush1.msra.mxu0 0.0
    %63 = vmatprep.subr.mxu0 0.0
    %64 = vmatpush1.msra.mxu0 0.0
    %65 = vmatprep.subr.mxu0 0.0
    %66 = vmatpush1.msra.mxu0 0.0
    %67 = vmatprep.subr.mxu0 0.0
    %68 = vmatpush1.msra.mxu0 0.0
    %69 = vmatprep.subr.mxu0 0.0
    %70 = vmatpush1.msra.mxu0 0.0
    %71 = vmatprep.subr.mxu0 0.0
    %72 = vmatpush1.msra.mxu0 0.0
    %73 = vmatprep.subr.mxu0 0.0
    %74 = vmatpush1.msra.mxu0 0.0
    %75 = vmatprep.subr.mxu0 0.0
    %76 = vmatpush1.msra.mxu0 0.0
    %77 = vmatprep.subr.mxu0 0.0
    %78 = vmatpush1.msra.mxu0 0.0
    %79 = vmatprep.subr.mxu0 0.0
    %80 = vmatpush1.msra.mxu0 0.0
    %81 = vmatprep.subr.mxu0 0.0
    %82 = vmatpush1.msra.mxu0 0.0
    %83 = vmatprep.subr.mxu0 0.0
    %84 = vmatpush1.msra.mxu0 0.0
    %85 = vmatprep.subr.mxu0 0.0
    %86 = vmatpush1.msra.mxu0 0.0
    %87 = vmatprep.subr.mxu0 0.0
    %88 = vmatpush1.msra.mxu0 0.0
    %89 = vmatprep.subr.mxu0 0.0
    %90 = vmatpush1.msra.mxu0 0.0
    %91 = vmatprep.subr.mxu0 0.0
    %92 = vmatpush1.msra.mxu0 0.0
    %93 = vmatprep.subr.mxu0 0.0
    %94 = vmatpush1.msra.mxu0 0.0
    %95 = vmatprep.subr.mxu0 0.0
    %96 = vmatpush1.msra.mxu0 0.0
    %97 = vmatprep.subr.mxu0 0.0
    %98 = vmatpush1.msra.mxu0 0.0
    %99 = vmatprep.subr.mxu0 0.0
    %100 = vmatpush1.msra.mxu0 0.0
    %101 = vmatprep.subr.mxu0 0.0
    %102 = vmatpush1.msra.mxu0 0.0
    %103 = vmatprep.subr.mxu0 0.0
    %104 = vmatpush1.msra.mxu0 0.0
    %105 = vmatprep.subr.mxu0 0.0
    %106 = vmatpush1.msra.mxu0 0.0
    %107 = vmatprep.subr.mxu0 0.0
    %108 = vmatpush1.msra.mxu0 0.0
    %109 = vmatprep.mubr.f32.mxu0 0.0
    %110 = vmatmul.mubr.f32.gmra.mrb[0].mxu0 %v40
    %v111 = vpop.f32.mrb[0].mxu0
    %v112 = vadd.f32 %v36, %v111
    %v113 = vpop.f32.mrb[0].mxu0
    %114 = vmatprep.mubr.f32.mxu0 0.0
    %115 = vmatmul.mubr.f32.gmra.mrb[0].mxu0 %v43
    %v116 = vpop.f32.mrb[0].mxu0
    %v117 = vadd.f32 %v36, %v116
    %v118 = vpop.f32.mrb[0].mxu0
    %119 = vdwg.mxu0
    %v120 = vld [vmem:[%s3] sm:$0xff]
    %v121 = vld [vmem:[%s3 + $0x8] sm:$0xff]
    %v122 = vld [vmem:[%s3 + $0x10] sm:$0xff]
    %v123 = vld [vmem:[%s3 + $0x18] sm:$0xff]
    %v124 = vld [vmem:[%s4] sm:$0x1]
    %v126 = vlaneseq
    %v127 = vshrl.u32 %v126, 7
    %v128 = vsub.s32 0, %v127
    %v129 = vrot.slane %v124, %v128
    %vm130 = vcmask 261120
    %v132 = vsel %vm130, 0.0, 0
    %134 = vmatprep.subr.mxu0 0.0
    %135 = vmatpush1.msra.mxu0 %v120
    %136 = vmatprep.subr.mxu0 0.0
    %137 = vmatpush1.msra.mxu0 %v121
    %138 = vmatprep.subr.mxu0 0.0
    %139 = vmatpush1.msra.mxu0 %v122
    %140 = vmatprep.subr.mxu0 0.0
    %141 = vmatpush1.msra.mxu0 %v123
    %142 = vmatprep.subr.mxu0 0.0
    %143 = vmatpush1.msra.mxu0 0.0
    %144 = vmatprep.subr.mxu0 0.0
    %145 = vmatpush1.msra.mxu0 0.0
    %146 = vmatprep.subr.mxu0 0.0
    %147 = vmatpush1.msra.mxu0 0.0
    %148 = vmatprep.subr.mxu0 0.0
    %149 = vmatpush1.msra.mxu0 0.0
    %150 = vmatprep.subr.mxu0 0.0
    %151 = vmatpush1.msra.mxu0 0.0
    %152 = vmatprep.subr.mxu0 0.0
    %153 = vmatpush1.msra.mxu0 0.0
    %154 = vmatprep.subr.mxu0 0.0
    %155 = vmatpush1.msra.mxu0 0.0
    %156 = vmatprep.subr.mxu0 0.0
    %157 = vmatpush1.msra.mxu0 0.0
    %158 = vmatprep.subr.mxu0 0.0
    %159 = vmatpush1.msra.mxu0 0.0
    %160 = vmatprep.subr.mxu0 0.0
    %161 = vmatpush1.msra.mxu0 0.0
    %162 = vmatprep.subr.mxu0 0.0
    %163 = vmatpush1.msra.mxu0 0.0
    %164 = vmatprep.subr.mxu0 0.0
    %165 = vmatpush1.msra.mxu0 0.0
    %166 = vmatprep.subr.mxu0 0.0
    %167 = vmatpush1.msra.mxu0 0.0
    %168 = vmatprep.subr.mxu0 0.0
    %169 = vmatpush1.msra.mxu0 0.0
    %170 = vmatprep.subr.mxu0 0.0
    %171 = vmatpush1.msra.mxu0 0.0
    %172 = vmatprep.subr.mxu0 0.0
    %173 = vmatpush1.msra.mxu0 0.0
    %174 = vmatprep.subr.mxu0 0.0
    %175 = vmatpush1.msra.mxu0 0.0
    %176 = vmatprep.subr.mxu0 0.0
    %177 = vmatpush1.msra.mxu0 0.0
    %178 = vmatprep.subr.mxu0 0.0
    %179 = vmatpush1.msra.mxu0 0.0
    %180 = vmatprep.subr.mxu0 0.0
    %181 = vmatpush1.msra.mxu0 0.0
    %182 = vmatprep.subr.mxu0 0.0
    %183 = vmatpush1.msra.mxu0 0.0
    %184 = vmatprep.subr.mxu0 0.0
    %185 = vmatpush1.msra.mxu0 0.0
    %186 = vmatprep.subr.mxu0 0.0
    %187 = vmatpush1.msra.mxu0 0.0
    %188 = vmatprep.subr.mxu0 0.0
    %189 = vmatpush1.msra.mxu0 0.0
    %190 = vmatprep.subr.mxu0 0.0
    %191 = vmatpush1.msra.mxu0 0.0
    %192 = vmatprep.subr.mxu0 0.0
    %193 = vmatpush1.msra.mxu0 0.0
    %194 = vmatprep.subr.mxu0 0.0
    %195 = vmatpush1.msra.mxu0 0.0
    %196 = vmatprep.subr.mxu0 0.0
    %197 = vmatpush1.msra.mxu0 0.0
    %198 = vmatprep.mubr.f32.mxu0 0.0
    %199 = vmatmul.mubr.f32.gmra.mrb[0].mxu0 %v132
    %v200 = vpop.f32.mrb[0].mxu0
    %v201 = vadd.f32 0.0, %v200
    %v202 = vpop.f32.mrb[0].mxu0
    %203 = vdwg.mxu0
    %v204 = vadd.f32 %v112, %v201
    %v205 = vxor.u32 %v204, 2147483648
    %v206 = vmul.f32 %v205, 1.442695
    %v207 = vpow.pop %v206
    %v208 = vadd.f32 %v207, 1.0
    %v209 = vrcp.pop %v208
    %v210 = vmul.f32 1.0, %v209
    %211 = vrot.lane.b32.xlu0 %v129, 64
    %v212 = vpop.permute.xlu0 %211
    %v214 = vadd.f32 %v201, %v212
    %216 = vrot.lane.b32.xlu0 %v214, 64
    %v217 = vpop.permute.xlu0 %216
    %v219 = vmul.f32 %v210, %v217
    %221 = vrot.lane.b32.xlu0 %v219, 64
    %v222 = vpop.permute.xlu0 %221
    %v224 = vadd.f32 %v112, %v222
    %v225 = vtanh.pop %v224
    %v226 = vsub.f32 1.0, %v210
    %228 = vrot.lane.b32.xlu0 %v225, 96
    %v229 = vpop.permute.xlu0 %228
    %v231 = vmul.f32 %v226, %v229
    %v232 = vmul.f32 %v210, 0.0
    %v233 = vadd.f32 %v231, %v232
    %235 = vrot.lane.b32.xlu0 %v233, 96
    %v236 = vpop.permute.xlu0 %235
    %v237 = vsel %vm130, %v236, 0
    %239 = vmatprep.subr.mxu0 0.0
    %240 = vmatpush1.msra.mxu0 %v120
    %241 = vmatprep.subr.mxu0 0.0
    %242 = vmatpush1.msra.mxu0 %v121
    %243 = vmatprep.subr.mxu0 0.0
    %244 = vmatpush1.msra.mxu0 %v122
    %245 = vmatprep.subr.mxu0 0.0
    %246 = vmatpush1.msra.mxu0 %v123
    %247 = vmatprep.subr.mxu0 0.0
    %248 = vmatpush1.msra.mxu0 0.0
    %249 = vmatprep.subr.mxu0 0.0
    %250 = vmatpush1.msra.mxu0 0.0
    %251 = vmatprep.subr.mxu0 0.0
    %252 = vmatpush1.msra.mxu0 0.0
    %253 = vmatprep.subr.mxu0 0.0
    %254 = vmatpush1.msra.mxu0 0.0
    %255 = vmatprep.subr.mxu0 0.0
    %256 = vmatpush1.msra.mxu0 0.0
    %257 = vmatprep.subr.mxu0 0.0
    %258 = vmatpush1.msra.mxu0 0.0
    %259 = vmatprep.subr.mxu0 0.0
    %260 = vmatpush1.msra.mxu0 0.0
    %261 = vmatprep.subr.mxu0 0.0
    %262 = vmatpush1.msra.mxu0 0.0
    %263 = vmatprep.subr.mxu0 0.0
    %264 = vmatpush1.msra.mxu0 0.0
    %265 = vmatprep.subr.mxu0 0.0
    %266 = vmatpush1.msra.mxu0 0.0
    %267 = vmatprep.subr.mxu0 0.0
    %268 = vmatpush1.msra.mxu0 0.0
    %269 = vmatprep.subr.mxu0 0.0
    %270 = vmatpush1.msra.mxu0 0.0
    %271 = vmatprep.subr.mxu0 0.0
    %272 = vmatpush1.msra.mxu0 0.0
    %273 = vmatprep.subr.mxu0 0.0
    %274 = vmatpush1.msra.mxu0 0.0
    %275 = vmatprep.subr.mxu0 0.0
    %276 = vmatpush1.msra.mxu0 0.0
    %277 = vmatprep.subr.mxu0 0.0
    %278 = vmatpush1.msra.mxu0 0.0
    %279 = vmatprep.subr.mxu0 0.0
    %280 = vmatpush1.msra.mxu0 0.0
    %281 = vmatprep.subr.mxu0 0.0
    %282 = vmatpush1.msra.mxu0 0.0
    %283 = vmatprep.subr.mxu0 0.0
    %284 = vmatpush1.msra.mxu0 0.0
    %285 = vmatprep.subr.mxu0 0.0
    %286 = vmatpush1.msra.mxu0 0.0
    %287 = vmatprep.subr.mxu0 0.0
    %288 = vmatpush1.msra.mxu0 0.0
    %289 = vmatprep.subr.mxu0 0.0
    %290 = vmatpush1.msra.mxu0 0.0
    %291 = vmatprep.subr.mxu0 0.0
    %292 = vmatpush1.msra.mxu0 0.0
    %293 = vmatprep.subr.mxu0 0.0
    %294 = vmatpush1.msra.mxu0 0.0
    %295 = vmatprep.subr.mxu0 0.0
    %296 = vmatpush1.msra.mxu0 0.0
    %297 = vmatprep.subr.mxu0 0.0
    %298 = vmatpush1.msra.mxu0 0.0
    %299 = vmatprep.subr.mxu0 0.0
    %300 = vmatpush1.msra.mxu0 0.0
    %301 = vmatprep.subr.mxu0 0.0
    %302 = vmatpush1.msra.mxu0 0.0
    %303 = vmatprep.mubr.f32.mxu0 0.0
    %304 = vmatmul.mubr.f32.gmra.mrb[0].mxu0 %v237
    %v305 = vpop.f32.mrb[0].mxu0
    %v306 = vadd.f32 0.0, %v305
    %v307 = vpop.f32.mrb[0].mxu0
    %308 = vdwg.mxu0
    %v310 = vrot.slane %v306, 6
    %v312 = vadd.f32 %v112, %v310
    %v313 = vxor.u32 %v312, 2147483648
    %v314 = vmul.f32 %v313, 1.442695
    %v315 = vpow.pop %v314
    %v316 = vadd.f32 %v315, 1.0
    %v317 = vrcp.pop %v316
    %v318 = vmul.f32 1.0, %v317
    %v319 = vadd.f32 %v306, %v212
    %v321 = vrot.slane %v319, 6
    %322 = vrot.lane.b32.xlu0 %v321, 64
    %v323 = vpop.permute.xlu0 %322
    %v325 = vmul.f32 %v318, %v323
    %327 = vrot.lane.b32.xlu0 %v325, 64
    %v328 = vpop.permute.xlu0 %327
    %v330 = vadd.f32 %v112, %v328
    %v331 = vtanh.pop %v330
    %v332 = vsub.f32 1.0, %v318
    %334 = vrot.lane.b32.xlu0 %v331, 96
    %v335 = vpop.permute.xlu0 %334
    %v337 = vmul.f32 %v332, %v335
    %v338 = vrot.slane %v233, 6
    %v340 = vmul.f32 %v318, %v338
    %v341 = vadd.f32 %v337, %v340
    %v343 = vrot.slane %v341, 2
    %344 = vrot.lane.b32.xlu0 %v343, 96
    %v345 = vpop.permute.xlu0 %344
    %v346 = vsel %vm130, %v345, 0
    %348 = vmatprep.subr.mxu0 0.0
    %349 = vmatpush1.msra.mxu0 %v120
    %350 = vmatprep.subr.mxu0 0.0
    %351 = vmatpush1.msra.mxu0 %v121
    %352 = vmatprep.subr.mxu0 0.0
    %353 = vmatpush1.msra.mxu0 %v122
    %354 = vmatprep.subr.mxu0 0.0
    %355 = vmatpush1.msra.mxu0 %v123
    %356 = vmatprep.subr.mxu0 0.0
    %357 = vmatpush1.msra.mxu0 0.0
    %358 = vmatprep.subr.mxu0 0.0
    %359 = vmatpush1.msra.mxu0 0.0
    %360 = vmatprep.subr.mxu0 0.0
    %361 = vmatpush1.msra.mxu0 0.0
    %362 = vmatprep.subr.mxu0 0.0
    %363 = vmatpush1.msra.mxu0 0.0
    %364 = vmatprep.subr.mxu0 0.0
    %365 = vmatpush1.msra.mxu0 0.0
    %366 = vmatprep.subr.mxu0 0.0
    %367 = vmatpush1.msra.mxu0 0.0
    %368 = vmatprep.subr.mxu0 0.0
    %369 = vmatpush1.msra.mxu0 0.0
    %370 = vmatprep.subr.mxu0 0.0
    %371 = vmatpush1.msra.mxu0 0.0
    %372 = vmatprep.subr.mxu0 0.0
    %373 = vmatpush1.msra.mxu0 0.0
    %374 = vmatprep.subr.mxu0 0.0
    %375 = vmatpush1.msra.mxu0 0.0
    %376 = vmatprep.subr.mxu0 0.0
    %377 = vmatpush1.msra.mxu0 0.0
    %378 = vmatprep.subr.mxu0 0.0
    %379 = vmatpush1.msra.mxu0 0.0
    %380 = vmatprep.subr.mxu0 0.0
    %381 = vmatpush1.msra.mxu0 0.0
    %382 = vmatprep.subr.mxu0 0.0
    %383 = vmatpush1.msra.mxu0 0.0
    %384 = vmatprep.subr.mxu0 0.0
    %385 = vmatpush1.msra.mxu0 0.0
    %386 = vmatprep.subr.mxu0 0.0
    %387 = vmatpush1.msra.mxu0 0.0
    %388 = vmatprep.subr.mxu0 0.0
    %389 = vmatpush1.msra.mxu0 0.0
    %390 = vmatprep.subr.mxu0 0.0
    %391 = vmatpush1.msra.mxu0 0.0
    %392 = vmatprep.subr.mxu0 0.0
    %393 = vmatpush1.msra.mxu0 0.0
    %394 = vmatprep.subr.mxu0 0.0
    %395 = vmatpush1.msra.mxu0 0.0
    %396 = vmatprep.subr.mxu0 0.0
    %397 = vmatpush1.msra.mxu0 0.0
    %398 = vmatprep.subr.mxu0 0.0
    %399 = vmatpush1.msra.mxu0 0.0
    %400 = vmatprep.subr.mxu0 0.0
    %401 = vmatpush1.msra.mxu0 0.0
    %402 = vmatprep.subr.mxu0 0.0
    %403 = vmatpush1.msra.mxu0 0.0
    %404 = vmatprep.subr.mxu0 0.0
    %405 = vmatpush1.msra.mxu0 0.0
    %406 = vmatprep.subr.mxu0 0.0
    %407 = vmatpush1.msra.mxu0 0.0
    %408 = vmatprep.subr.mxu0 0.0
    %409 = vmatpush1.msra.mxu0 0.0
    %410 = vmatprep.subr.mxu0 0.0
    %411 = vmatpush1.msra.mxu0 0.0
    %412 = vmatprep.mubr.f32.mxu0 0.0
    %413 = vmatmul.mubr.f32.gmra.mrb[0].mxu0 %v346
    %v414 = vpop.f32.mrb[0].mxu0
    %v415 = vadd.f32 0.0, %v414
    %v416 = vpop.f32.mrb[0].mxu0
    %417 = vdwg.mxu0
    %v419 = vrot.slane %v415, 4
    %v421 = vadd.f32 %v112, %v419
    %v422 = vxor.u32 %v421, 2147483648
    %v423 = vmul.f32 %v422, 1.442695
    %v424 = vpow.pop %v423
    %v425 = vadd.f32 %v424, 1.0
    %v426 = vrcp.pop %v425
    %v427 = vmul.f32 1.0, %v426
    %v428 = vadd.f32 %v415, %v212
    %v430 = vrot.slane %v428, 4
    %431 = vrot.lane.b32.xlu0 %v430, 64
    %v432 = vpop.permute.xlu0 %431
    %v434 = vmul.f32 %v427, %v432
    %436 = vrot.lane.b32.xlu0 %v434, 64
    %v437 = vpop.permute.xlu0 %436
    %v439 = vadd.f32 %v112, %v437
    %v440 = vtanh.pop %v439
    %v441 = vsub.f32 1.0, %v427
    %443 = vrot.lane.b32.xlu0 %v440, 96
    %v444 = vpop.permute.xlu0 %443
    %v446 = vmul.f32 %v441, %v444
    %v447 = vrot.slane %v341, 6
    %v449 = vmul.f32 %v427, %v447
    %v450 = vadd.f32 %v446, %v449
    %v452 = vrot.slane %v450, 4
    %453 = vrot.lane.b32.xlu0 %v452, 96
    %v454 = vpop.permute.xlu0 %453
    %v455 = vsel %vm130, %v454, 0
    %457 = vmatprep.subr.mxu0 0.0
    %458 = vmatpush1.msra.mxu0 %v120
    %459 = vmatprep.subr.mxu0 0.0
    %460 = vmatpush1.msra.mxu0 %v121
    %461 = vmatprep.subr.mxu0 0.0
    %462 = vmatpush1.msra.mxu0 %v122
    %463 = vmatprep.subr.mxu0 0.0
    %464 = vmatpush1.msra.mxu0 %v123
    %465 = vmatprep.subr.mxu0 0.0
    %466 = vmatpush1.msra.mxu0 0.0
    %467 = vmatprep.subr.mxu0 0.0
    %468 = vmatpush1.msra.mxu0 0.0
    %469 = vmatprep.subr.mxu0 0.0
    %470 = vmatpush1.msra.mxu0 0.0
    %471 = vmatprep.subr.mxu0 0.0
    %472 = vmatpush1.msra.mxu0 0.0
    %473 = vmatprep.subr.mxu0 0.0
    %474 = vmatpush1.msra.mxu0 0.0
    %475 = vmatprep.subr.mxu0 0.0
    %476 = vmatpush1.msra.mxu0 0.0
    %477 = vmatprep.subr.mxu0 0.0
    %478 = vmatpush1.msra.mxu0 0.0
    %479 = vmatprep.subr.mxu0 0.0
    %480 = vmatpush1.msra.mxu0 0.0
    %481 = vmatprep.subr.mxu0 0.0
    %482 = vmatpush1.msra.mxu0 0.0
    %483 = vmatprep.subr.mxu0 0.0
    %484 = vmatpush1.msra.mxu0 0.0
    %485 = vmatprep.subr.mxu0 0.0
    %486 = vmatpush1.msra.mxu0 0.0
    %487 = vmatprep.subr.mxu0 0.0
    %488 = vmatpush1.msra.mxu0 0.0
    %489 = vmatprep.subr.mxu0 0.0
    %490 = vmatpush1.msra.mxu0 0.0
    %491 = vmatprep.subr.mxu0 0.0
    %492 = vmatpush1.msra.mxu0 0.0
    %493 = vmatprep.subr.mxu0 0.0
    %494 = vmatpush1.msra.mxu0 0.0
    %495 = vmatprep.subr.mxu0 0.0
    %496 = vmatpush1.msra.mxu0 0.0
    %497 = vmatprep.subr.mxu0 0.0
    %498 = vmatpush1.msra.mxu0 0.0
    %499 = vmatprep.subr.mxu0 0.0
    %500 = vmatpush1.msra.mxu0 0.0
    %501 = vmatprep.subr.mxu0 0.0
    %502 = vmatpush1.msra.mxu0 0.0
    %503 = vmatprep.subr.mxu0 0.0
    %504 = vmatpush1.msra.mxu0 0.0
    %505 = vmatprep.subr.mxu0 0.0
    %506 = vmatpush1.msra.mxu0 0.0
    %507 = vmatprep.subr.mxu0 0.0
    %508 = vmatpush1.msra.mxu0 0.0
    %509 = vmatprep.subr.mxu0 0.0
    %510 = vmatpush1.msra.mxu0 0.0
    %511 = vmatprep.subr.mxu0 0.0
    %512 = vmatpush1.msra.mxu0 0.0
    %513 = vmatprep.subr.mxu0 0.0
    %514 = vmatpush1.msra.mxu0 0.0
    %515 = vmatprep.subr.mxu0 0.0
    %516 = vmatpush1.msra.mxu0 0.0
    %517 = vmatprep.subr.mxu0 0.0
    %518 = vmatpush1.msra.mxu0 0.0
    %519 = vmatprep.subr.mxu0 0.0
    %520 = vmatpush1.msra.mxu0 0.0
    %521 = vmatprep.mubr.f32.mxu0 0.0
    %522 = vmatmul.mubr.f32.gmra.mrb[0].mxu0 %v455
    %v523 = vpop.f32.mrb[0].mxu0
    %v524 = vadd.f32 0.0, %v523
    %v525 = vpop.f32.mrb[0].mxu0
    %526 = vdwg.mxu0
    %v528 = vrot.slane %v524, 2
    %v530 = vadd.f32 %v112, %v528
    %v531 = vxor.u32 %v530, 2147483648
    %v532 = vmul.f32 %v531, 1.442695
    %v533 = vpow.pop %v532
    %v534 = vadd.f32 %v533, 1.0
    %v535 = vrcp.pop %v534
    %v536 = vmul.f32 1.0, %v535
    %v537 = vadd.f32 %v524, %v212
    %v539 = vrot.slane %v537, 2
    %540 = vrot.lane.b32.xlu0 %v539, 64
    %v541 = vpop.permute.xlu0 %540
    %v543 = vmul.f32 %v536, %v541
    %545 = vrot.lane.b32.xlu0 %v543, 64
    %v546 = vpop.permute.xlu0 %545
    %v548 = vadd.f32 %v112, %v546
    %v549 = vtanh.pop %v548
    %v550 = vsub.f32 1.0, %v536
    %552 = vrot.lane.b32.xlu0 %v549, 96
    %v553 = vpop.permute.xlu0 %552
    %v555 = vmul.f32 %v550, %v553
    %v556 = vrot.slane %v450, 6
    %v558 = vmul.f32 %v536, %v556
    %v559 = vadd.f32 %v555, %v558
    %v561 = vrot.slane %v559, 6
    %562 = vrot.lane.b32.xlu0 %v561, 96
    %v563 = vpop.permute.xlu0 %562
    %v564 = vsel %vm130, %v563, 0
    %566 = vmatprep.subr.mxu0 0.0
    %567 = vmatpush1.msra.mxu0 %v120
    %568 = vmatprep.subr.mxu0 0.0
    %569 = vmatpush1.msra.mxu0 %v121
    %570 = vmatprep.subr.mxu0 0.0
    %571 = vmatpush1.msra.mxu0 %v122
    %572 = vmatprep.subr.mxu0 0.0
    %573 = vmatpush1.msra.mxu0 %v123
    %574 = vmatprep.subr.mxu0 0.0
    %575 = vmatpush1.msra.mxu0 0.0
    %576 = vmatprep.subr.mxu0 0.0
    %577 = vmatpush1.msra.mxu0 0.0
    %578 = vmatprep.subr.mxu0 0.0
    %579 = vmatpush1.msra.mxu0 0.0
    %580 = vmatprep.subr.mxu0 0.0
    %581 = vmatpush1.msra.mxu0 0.0
    %582 = vmatprep.subr.mxu0 0.0
    %583 = vmatpush1.msra.mxu0 0.0
    %584 = vmatprep.subr.mxu0 0.0
    %585 = vmatpush1.msra.mxu0 0.0
    %586 = vmatprep.subr.mxu0 0.0
    %587 = vmatpush1.msra.mxu0 0.0
    %588 = vmatprep.subr.mxu0 0.0
    %589 = vmatpush1.msra.mxu0 0.0
    %590 = vmatprep.subr.mxu0 0.0
    %591 = vmatpush1.msra.mxu0 0.0
    %592 = vmatprep.subr.mxu0 0.0
    %593 = vmatpush1.msra.mxu0 0.0
    %594 = vmatprep.subr.mxu0 0.0
    %595 = vmatpush1.msra.mxu0 0.0
    %596 = vmatprep.subr.mxu0 0.0
    %597 = vmatpush1.msra.mxu0 0.0
    %598 = vmatprep.subr.mxu0 0.0
    %599 = vmatpush1.msra.mxu0 0.0
    %600 = vmatprep.subr.mxu0 0.0
    %601 = vmatpush1.msra.mxu0 0.0
    %602 = vmatprep.subr.mxu0 0.0
    %603 = vmatpush1.msra.mxu0 0.0
    %604 = vmatprep.subr.mxu0 0.0
    %605 = vmatpush1.msra.mxu0 0.0
    %606 = vmatprep.subr.mxu0 0.0
    %607 = vmatpush1.msra.mxu0 0.0
    %608 = vmatprep.subr.mxu0 0.0
    %609 = vmatpush1.msra.mxu0 0.0
    %610 = vmatprep.subr.mxu0 0.0
    %611 = vmatpush1.msra.mxu0 0.0
    %612 = vmatprep.subr.mxu0 0.0
    %613 = vmatpush1.msra.mxu0 0.0
    %614 = vmatprep.subr.mxu0 0.0
    %615 = vmatpush1.msra.mxu0 0.0
    %616 = vmatprep.subr.mxu0 0.0
    %617 = vmatpush1.msra.mxu0 0.0
    %618 = vmatprep.subr.mxu0 0.0
    %619 = vmatpush1.msra.mxu0 0.0
    %620 = vmatprep.subr.mxu0 0.0
    %621 = vmatpush1.msra.mxu0 0.0
    %622 = vmatprep.subr.mxu0 0.0
    %623 = vmatpush1.msra.mxu0 0.0
    %624 = vmatprep.subr.mxu0 0.0
    %625 = vmatpush1.msra.mxu0 0.0
    %626 = vmatprep.subr.mxu0 0.0
    %627 = vmatpush1.msra.mxu0 0.0
    %628 = vmatprep.subr.mxu0 0.0
    %629 = vmatpush1.msra.mxu0 0.0
    %630 = vmatprep.mubr.f32.mxu0 0.0
    %631 = vmatmul.mubr.f32.gmra.mrb[0].mxu0 %v564
    %v632 = vpop.f32.mrb[0].mxu0
    %v633 = vadd.f32 0.0, %v632
    %v634 = vpop.f32.mrb[0].mxu0
    %635 = vdwg.mxu0
    %v636 = vadd.f32 %v117, %v633
    %v637 = vxor.u32 %v636, 2147483648
    %v638 = vmul.f32 %v637, 1.442695
    %v639 = vpow.pop %v638
    %v640 = vadd.f32 %v639, 1.0
    %v641 = vrcp.pop %v640
    %v642 = vmul.f32 1.0, %v641
    %v643 = vadd.f32 %v633, %v212
    %645 = vrot.lane.b32.xlu0 %v643, 64
    %v646 = vpop.permute.xlu0 %645
    %v648 = vmul.f32 %v642, %v646
    %650 = vrot.lane.b32.xlu0 %v648, 64
    %v651 = vpop.permute.xlu0 %650
    %v653 = vadd.f32 %v117, %v651
    %v654 = vtanh.pop %v653
    %v655 = vsub.f32 1.0, %v642
    %657 = vrot.lane.b32.xlu0 %v654, 96
    %v658 = vpop.permute.xlu0 %657
    %v660 = vmul.f32 %v655, %v658
    %v662 = vmul.f32 %v642, %v561
    %v663 = vadd.f32 %v660, %v662
    %665 = vrot.lane.b32.xlu0 %v663, 96
    %v666 = vpop.permute.xlu0 %665
    %v667 = vsel %vm130, %v666, 0
    %669 = vmatprep.subr.mxu0 0.0
    %670 = vmatpush1.msra.mxu0 %v120
    %671 = vmatprep.subr.mxu0 0.0
    %672 = vmatpush1.msra.mxu0 %v121
    %673 = vmatprep.subr.mxu0 0.0
    %674 = vmatpush1.msra.mxu0 %v122
    %675 = vmatprep.subr.mxu0 0.0
    %676 = vmatpush1.msra.mxu0 %v123
    %677 = vmatprep.subr.mxu0 0.0
    %678 = vmatpush1.msra.mxu0 0.0
    %679 = vmatprep.subr.mxu0 0.0
    %680 = vmatpush1.msra.mxu0 0.0
    %681 = vmatprep.subr.mxu0 0.0
    %682 = vmatpush1.msra.mxu0 0.0
    %683 = vmatprep.subr.mxu0 0.0
    %684 = vmatpush1.msra.mxu0 0.0
    %685 = vmatprep.subr.mxu0 0.0
    %686 = vmatpush1.msra.mxu0 0.0
    %687 = vmatprep.subr.mxu0 0.0
    %688 = vmatpush1.msra.mxu0 0.0
    %689 = vmatprep.subr.mxu0 0.0
    %690 = vmatpush1.msra.mxu0 0.0
    %691 = vmatprep.subr.mxu0 0.0
    %692 = vmatpush1.msra.mxu0 0.0
    %693 = vmatprep.subr.mxu0 0.0
    %694 = vmatpush1.msra.mxu0 0.0
    %695 = vmatprep.subr.mxu0 0.0
    %696 = vmatpush1.msra.mxu0 0.0
    %697 = vmatprep.subr.mxu0 0.0
    %698 = vmatpush1.msra.mxu0 0.0
    %699 = vmatprep.subr.mxu0 0.0
    %700 = vmatpush1.msra.mxu0 0.0
    %701 = vmatprep.subr.mxu0 0.0
    %702 = vmatpush1.msra.mxu0 0.0
    %703 = vmatprep.subr.mxu0 0.0
    %704 = vmatpush1.msra.mxu0 0.0
    %705 = vmatprep.subr.mxu0 0.0
    %706 = vmatpush1.msra.mxu0 0.0
    %707 = vmatprep.subr.mxu0 0.0
    %708 = vmatpush1.msra.mxu0 0.0
    %709 = vmatprep.subr.mxu0 0.0
    %710 = vmatpush1.msra.mxu0 0.0
    %711 = vmatprep.subr.mxu0 0.0
    %712 = vmatpush1.msra.mxu0 0.0
    %713 = vmatprep.subr.mxu0 0.0
    %714 = vmatpush1.msra.mxu0 0.0
    %715 = vmatprep.subr.mxu0 0.0
    %716 = vmatpush1.msra.mxu0 0.0
    %717 = vmatprep.subr.mxu0 0.0
    %718 = vmatpush1.msra.mxu0 0.0
    %719 = vmatprep.subr.mxu0 0.0
    %720 = vmatpush1.msra.mxu0 0.0
    %721 = vmatprep.subr.mxu0 0.0
    %722 = vmatpush1.msra.mxu0 0.0
    %723 = vmatprep.subr.mxu0 0.0
    %724 = vmatpush1.msra.mxu0 0.0
    %725 = vmatprep.subr.mxu0 0.0
    %726 = vmatpush1.msra.mxu0 0.0
    %727 = vmatprep.subr.mxu0 0.0
    %728 = vmatpush1.msra.mxu0 0.0
    %729 = vmatprep.subr.mxu0 0.0
    %730 = vmatpush1.msra.mxu0 0.0
    %731 = vmatprep.subr.mxu0 0.0
    %732 = vmatpush1.msra.mxu0 0.0
    %733 = vmatprep.mubr.f32.mxu0 0.0
    %734 = vmatmul.mubr.f32.gmra.mrb[0].mxu0 %v667
    %v735 = vpop.f32.mrb[0].mxu0
    %v736 = vadd.f32 0.0, %v735
    %v737 = vpop.f32.mrb[0].mxu0
    %738 = vdwg.mxu0
    %v740 = vrot.slane %v736, 6
    %v742 = vadd.f32 %v117, %v740
    %v743 = vxor.u32 %v742, 2147483648
    %v744 = vmul.f32 %v743, 1.442695
    %v745 = vpow.pop %v744
    %v746 = vadd.f32 %v745, 1.0
    %v747 = vrcp.pop %v746
    %v748 = vmul.f32 1.0, %v747
    %v749 = vadd.f32 %v736, %v212
    %v751 = vrot.slane %v749, 6
    %752 = vrot.lane.b32.xlu0 %v751, 64
    %v753 = vpop.permute.xlu0 %752
    %v755 = vmul.f32 %v748, %v753
    %757 = vrot.lane.b32.xlu0 %v755, 64
    %v758 = vpop.permute.xlu0 %757
    %v760 = vadd.f32 %v117, %v758
    %v761 = vtanh.pop %v760
    %v762 = vsub.f32 1.0, %v748
    %764 = vrot.lane.b32.xlu0 %v761, 96
    %v765 = vpop.permute.xlu0 %764
    %v767 = vmul.f32 %v762, %v765
    %v768 = vrot.slane %v663, 6
    %v770 = vmul.f32 %v748, %v768
    %v771 = vadd.f32 %v767, %v770
    %v773 = vrot.slane %v771, 2
    %774 = vrot.lane.b32.xlu0 %v773, 96
    %v775 = vpop.permute.xlu0 %774
    %v776 = vsel %vm130, %v775, 0
    %778 = vmatprep.subr.mxu0 0.0
    %779 = vmatpush1.msra.mxu0 %v120
    %780 = vmatprep.subr.mxu0 0.0
    %781 = vmatpush1.msra.mxu0 %v121
    %782 = vmatprep.subr.mxu0 0.0
    %783 = vmatpush1.msra.mxu0 %v122
    %784 = vmatprep.subr.mxu0 0.0
    %785 = vmatpush1.msra.mxu0 %v123
    %786 = vmatprep.subr.mxu0 0.0
    %787 = vmatpush1.msra.mxu0 0.0
    %788 = vmatprep.subr.mxu0 0.0
    %789 = vmatpush1.msra.mxu0 0.0
    %790 = vmatprep.subr.mxu0 0.0
    %791 = vmatpush1.msra.mxu0 0.0
    %792 = vmatprep.subr.mxu0 0.0
    %793 = vmatpush1.msra.mxu0 0.0
    %794 = vmatprep.subr.mxu0 0.0
    %795 = vmatpush1.msra.mxu0 0.0
    %796 = vmatprep.subr.mxu0 0.0
    %797 = vmatpush1.msra.mxu0 0.0
    %798 = vmatprep.subr.mxu0 0.0
    %799 = vmatpush1.msra.mxu0 0.0
    %800 = vmatprep.subr.mxu0 0.0
    %801 = vmatpush1.msra.mxu0 0.0
    %802 = vmatprep.subr.mxu0 0.0
    %803 = vmatpush1.msra.mxu0 0.0
    %804 = vmatprep.subr.mxu0 0.0
    %805 = vmatpush1.msra.mxu0 0.0
    %806 = vmatprep.subr.mxu0 0.0
    %807 = vmatpush1.msra.mxu0 0.0
    %808 = vmatprep.subr.mxu0 0.0
    %809 = vmatpush1.msra.mxu0 0.0
    %810 = vmatprep.subr.mxu0 0.0
    %811 = vmatpush1.msra.mxu0 0.0
    %812 = vmatprep.subr.mxu0 0.0
    %813 = vmatpush1.msra.mxu0 0.0
    %814 = vmatprep.subr.mxu0 0.0
    %815 = vmatpush1.msra.mxu0 0.0
    %816 = vmatprep.subr.mxu0 0.0
    %817 = vmatpush1.msra.mxu0 0.0
    %818 = vmatprep.subr.mxu0 0.0
    %819 = vmatpush1.msra.mxu0 0.0
    %820 = vmatprep.subr.mxu0 0.0
    %821 = vmatpush1.msra.mxu0 0.0
    %822 = vmatprep.subr.mxu0 0.0
    %823 = vmatpush1.msra.mxu0 0.0
    %824 = vmatprep.subr.mxu0 0.0
    %825 = vmatpush1.msra.mxu0 0.0
    %826 = vmatprep.subr.mxu0 0.0
    %827 = vmatpush1.msra.mxu0 0.0
    %828 = vmatprep.subr.mxu0 0.0
    %829 = vmatpush1.msra.mxu0 0.0
    %830 = vmatprep.subr.mxu0 0.0
    %831 = vmatpush1.msra.mxu0 0.0
    %832 = vmatprep.subr.mxu0 0.0
    %833 = vmatpush1.msra.mxu0 0.0
    %834 = vmatprep.subr.mxu0 0.0
    %835 = vmatpush1.msra.mxu0 0.0
    %836 = vmatprep.subr.mxu0 0.0
    %837 = vmatpush1.msra.mxu0 0.0
    %838 = vmatprep.subr.mxu0 0.0
    %839 = vmatpush1.msra.mxu0 0.0
    %840 = vmatprep.subr.mxu0 0.0
    %841 = vmatpush1.msra.mxu0 0.0
    %842 = vmatprep.mubr.f32.mxu0 0.0
    %843 = vmatmul.mubr.f32.gmra.mrb[0].mxu0 %v776
    %v844 = vpop.f32.mrb[0].mxu0
    %v845 = vadd.f32 0.0, %v844
    %v846 = vpop.f32.mrb[0].mxu0
    %847 = vdwg.mxu0
    %v849 = vrot.slane %v845, 4
    %v851 = vadd.f32 %v117, %v849
    %v852 = vxor.u32 %v851, 2147483648
    %v853 = vmul.f32 %v852, 1.442695
    %v854 = vpow.pop %v853
    %v855 = vadd.f32 %v854, 1.0
    %v856 = vrcp.pop %v855
    %v857 = vmul.f32 1.0, %v856
    %v858 = vadd.f32 %v845, %v212
    %v860 = vrot.slane %v858, 4
    %861 = vrot.lane.b32.xlu0 %v860, 64
    %v862 = vpop.permute.xlu0 %861
    %v864 = vmul.f32 %v857, %v862
    %866 = vrot.lane.b32.xlu0 %v864, 64
    %v867 = vpop.permute.xlu0 %866
    %v869 = vadd.f32 %v117, %v867
    %v870 = vtanh.pop %v869
    %v871 = vsub.f32 1.0, %v857
    %873 = vrot.lane.b32.xlu0 %v870, 96
    %v874 = vpop.permute.xlu0 %873
    %v876 = vmul.f32 %v871, %v874
    %v877 = vrot.slane %v771, 6
    %v879 = vmul.f32 %v857, %v877
    %v880 = vadd.f32 %v876, %v879
    %v882 = vrot.slane %v880, 4
    %883 = vrot.lane.b32.xlu0 %v882, 96
    %v884 = vpop.permute.xlu0 %883
    %v885 = vsel %vm130, %v884, 0
    %887 = vmatprep.subr.mxu0 0.0
    %888 = vmatpush1.msra.mxu0 %v120
    %889 = vmatprep.subr.mxu0 0.0
    %890 = vmatpush1.msra.mxu0 %v121
    %891 = vmatprep.subr.mxu0 0.0
    %892 = vmatpush1.msra.mxu0 %v122
    %893 = vmatprep.subr.mxu0 0.0
    %894 = vmatpush1.msra.mxu0 %v123
    %895 = vmatprep.subr.mxu0 0.0
    %896 = vmatpush1.msra.mxu0 0.0
    %897 = vmatprep.subr.mxu0 0.0
    %898 = vmatpush1.msra.mxu0 0.0
    %899 = vmatprep.subr.mxu0 0.0
    %900 = vmatpush1.msra.mxu0 0.0
    %901 = vmatprep.subr.mxu0 0.0
    %902 = vmatpush1.msra.mxu0 0.0
    %903 = vmatprep.subr.mxu0 0.0
    %904 = vmatpush1.msra.mxu0 0.0
    %905 = vmatprep.subr.mxu0 0.0
    %906 = vmatpush1.msra.mxu0 0.0
    %907 = vmatprep.subr.mxu0 0.0
    %908 = vmatpush1.msra.mxu0 0.0
    %909 = vmatprep.subr.mxu0 0.0
    %910 = vmatpush1.msra.mxu0 0.0
    %911 = vmatprep.subr.mxu0 0.0
    %912 = vmatpush1.msra.mxu0 0.0
    %913 = vmatprep.subr.mxu0 0.0
    %914 = vmatpush1.msra.mxu0 0.0
    %915 = vmatprep.subr.mxu0 0.0
    %916 = vmatpush1.msra.mxu0 0.0
    %917 = vmatprep.subr.mxu0 0.0
    %918 = vmatpush1.msra.mxu0 0.0
    %919 = vmatprep.subr.mxu0 0.0
    %920 = vmatpush1.msra.mxu0 0.0
    %921 = vmatprep.subr.mxu0 0.0
    %922 = vmatpush1.msra.mxu0 0.0
    %923 = vmatprep.subr.mxu0 0.0
    %924 = vmatpush1.msra.mxu0 0.0
    %925 = vmatprep.subr.mxu0 0.0
    %926 = vmatpush1.msra.mxu0 0.0
    %927 = vmatprep.subr.mxu0 0.0
    %928 = vmatpush1.msra.mxu0 0.0
    %929 = vmatprep.subr.mxu0 0.0
    %930 = vmatpush1.msra.mxu0 0.0
    %931 = vmatprep.subr.mxu0 0.0
    %932 = vmatpush1.msra.mxu0 0.0
    %933 = vmatprep.subr.mxu0 0.0
    %934 = vmatpush1.msra.mxu0 0.0
    %935 = vmatprep.subr.mxu0 0.0
    %936 = vmatpush1.msra.mxu0 0.0
    %937 = vmatprep.subr.mxu0 0.0
    %938 = vmatpush1.msra.mxu0 0.0
    %939 = vmatprep.subr.mxu0 0.0
    %940 = vmatpush1.msra.mxu0 0.0
    %941 = vmatprep.subr.mxu0 0.0
    %942 = vmatpush1.msra.mxu0 0.0
    %943 = vmatprep.subr.mxu0 0.0
    %944 = vmatpush1.msra.mxu0 0.0
    %945 = vmatprep.subr.mxu0 0.0
    %946 = vmatpush1.msra.mxu0 0.0
    %947 = vmatprep.subr.mxu0 0.0
    %948 = vmatpush1.msra.mxu0 0.0
    %949 = vmatprep.subr.mxu0 0.0
    %950 = vmatpush1.msra.mxu0 0.0
    %951 = vmatprep.mubr.f32.mxu0 0.0
    %952 = vmatmul.mubr.f32.gmra.mrb[0].mxu0 %v885
    %v953 = vpop.f32.mrb[0].mxu0
    %v954 = vadd.f32 0.0, %v953
    %v955 = vpop.f32.mrb[0].mxu0
    %956 = vdwg.mxu0
    %v958 = vrot.slane %v954, 2
    %v960 = vadd.f32 %v117, %v958
    %v961 = vxor.u32 %v960, 2147483648
    %v962 = vmul.f32 %v961, 1.442695
    %v963 = vpow.pop %v962
    %v964 = vadd.f32 %v963, 1.0
    %v965 = vrcp.pop %v964
    %v966 = vmul.f32 1.0, %v965
    %v967 = vadd.f32 %v954, %v212
    %v969 = vrot.slane %v967, 2
    %970 = vrot.lane.b32.xlu0 %v969, 64
    %v971 = vpop.permute.xlu0 %970
    %v973 = vmul.f32 %v966, %v971
    %975 = vrot.lane.b32.xlu0 %v973, 64
    %v976 = vpop.permute.xlu0 %975
    %v978 = vadd.f32 %v117, %v976
    %v979 = vtanh.pop %v978
    %v980 = vsub.f32 1.0, %v966
    %982 = vrot.lane.b32.xlu0 %v979, 96
    %v983 = vpop.permute.xlu0 %982
    %v985 = vmul.f32 %v980, %v983
    %v986 = vrot.slane %v880, 6
    %v988 = vmul.f32 %v966, %v986
    %v989 = vadd.f32 %v985, %v988
    %991 = vrot.lane.b32.xlu0 %v989, 96
    %v992 = vpop.permute.xlu0 %991
    %vm994 = vcmask 261126
    %995 = vst.msk [vmem:[#allocation2 - $0x6] sm:$0xc0] %vm994, %v992
    // Predicated region
    $region22: #{txt_rnn_forward.1} parent=1 // pred_check
      _
    $region23: #{txt_rnn_forward.1} parent=1 // pred_check_branch
      %997 = sbr.rel (0) target = $region25
    $region24: #{txt_rnn_forward.1} parent=1 // pred_region
      %s999 = ssub.s32 32, 32
      %1000 = vsyncadd [#allocation3], %s999
      %s1002 = sshll.u32 [#allocation2], 4
      %s1003 = int_to_ptr.vmem [resolvable:$true] %s1002
      %1005 = dma.vmem_to_hbm [thread:$0]  %s1003, 32, %s5, [#allocation3]
    $region25: #{txt_rnn_forward.1} parent=1 // pred_fallthru
      _
    // Predicated region
    $region26: #{txt_rnn_forward.1} parent=1 // pred_check
      _
    $region27: #{txt_rnn_forward.1} parent=1 // pred_check_branch
      %1007 = sbr.rel (0) target = $region29
    $region28: #{txt_rnn_forward.1} parent=1 // pred_region
      %1008 = dma.done [#allocation3], 32
    $region29: #{txt_rnn_forward.1} parent=1 // pred_fallthru
      _
    %1009 = vsyncpa [#allocation3], 1

</llo_original>
